<compile_context>
chip_gen: v7x
topology: tpu7x:2x2x1
jax: 0.10.0
libtpu: 0.0.40
codegen_flags: <defaults>
</compile_context>

<pallas_src>
import math

import jax
import jax.numpy as jnp
import numpy as np
from jax.experimental import pallas as pl
from jax.experimental.pallas import tpu as pltpu


# ----------------------------------------------------------------------------
# "connections" structure (chromosome -> gene -> list of SNP indices), built
# deterministically in-script.  Only the *lengths* of the SNP lists matter for
# the forward pass (SNPs are consumed contiguously from x).
# ----------------------------------------------------------------------------
def sortAllSNPs(connections):
    result = {}
    for i in connections.keys():
        temp = connections[i]
        for j in temp.keys():
            temp[j] = sorted(temp[j])
        result[i] = temp
    return result


def build_connections(genes_per_chrom=96, num_chroms=2):
    sizes_cycle = [3, 5, 12, 7, 4, 9, 16, 8, 21, 15]
    connections = {}
    snp_id = 0
    g = 0
    for c in range(num_chroms):
        chrom = {}
        for _ in range(genes_per_chrom):
            n = sizes_cycle[g % len(sizes_cycle)]
            chrom["gene%04d" % g] = list(range(snp_id, snp_id + n))[::-1]
            snp_id += n
            g += 1
        connections["chr%d" % (c + 1)] = chrom
    return connections


def gene_sizes(connections):
    sizes = []
    for i in connections.keys():
        for j in connections[i].keys():
            sizes.append(len(connections[i][j]))
    return sizes


def _round_up(a, m):
    return (a + m - 1) // m * m


# ----------------------------------------------------------------------------
# Pallas kernel: banded (per-gene-tile) linear + bias + fused LeakyReLU.
# ----------------------------------------------------------------------------
def snp_to_gene_kernel(off_ref, x_ref, w_ref, b_ref, o_ref, acc_ref):
    # off_ref: (num_gene_tiles,) int32 in SMEM (used only by the index_maps)
    # x_ref:   (TB, KB)  bf16      w_ref: (KB, TN) bf16
    # b_ref:   (1, TN)   f32       o_ref: (TB, TN) f32
    # acc_ref: (TB, TN)  f32 VMEM scratch accumulator
    del off_ref
    k = pl.program_id(2)

    @pl.when(k == 0)
    def _():
        acc_ref[...] = jnp.zeros_like(acc_ref)

    acc_ref[...] += jnp.dot(x_ref[...], w_ref[...],
                            preferred_element_type=jnp.float32)

    @pl.when(k == pl.num_programs(2) - 1)
    def _():
        y = acc_ref[...] + b_ref[...]
        # LeakyReLU(0.2) o LeakyReLU(0.1) == single select with slope 0.02
        o_ref[...] = jnp.where(y >= 0, y, 0.02 * y).astype(o_ref.dtype)


def snp_to_gene(x_pad, w_slabs, b_pad, off_blocks, *, TB, TN, KB):
    B_pad, S_pad = x_pad.shape
    num_tiles, K_pad, _ = w_slabs.shape
    G_pad = b_pad.shape[1]
    grid = (B_pad // TB, G_pad // TN, K_pad // KB)

    return pl.pallas_call(
        snp_to_gene_kernel,
        out_shape=jax.ShapeDtypeStruct((B_pad, G_pad), jnp.float32),
        grid_spec=pltpu.PrefetchScalarGridSpec(
            num_scalar_prefetch=1,
            grid=grid,
            in_specs=[
                # x window: batch tile i, SNP block (tile-offset + k)
                pl.BlockSpec((TB, KB), lambda i, j, k, off: (i, off[j] + k)),
                # banded weight slab for gene tile j, SNP block k
                pl.BlockSpec((None, KB, TN), lambda i, j, k, off: (j, k, 0)),
                # bias for gene tile j
                pl.BlockSpec((1, TN), lambda i, j, k, off: (0, j)),
            ],
            out_specs=pl.BlockSpec((TB, TN), lambda i, j, k, off: (i, j)),
            scratch_shapes=[pltpu.VMEM((TB, TN), jnp.float32)],
        ),
        compiler_params=pltpu.CompilerParams(
            dimension_semantics=("parallel", "parallel", "arbitrary"),
            vmem_limit_bytes=32 * 1024 * 1024,
        ),
    )(off_blocks, x_pad, w_slabs, b_pad)


# ----------------------------------------------------------------------------
# Deterministic parameter construction (matches nn.Linear(n, 1) init ranges:
# uniform(-1/sqrt(n), 1/sqrt(n)) per gene), packed into banded per-tile slabs.
# ----------------------------------------------------------------------------
def build_packed_params(sizes, key, *, TN=128, KB=128):
    sizes = [int(n) for n in sizes]
    G = len(sizes)
    S = int(sum(sizes))
    starts = np.zeros(G + 1, np.int64)
    starts[1:] = np.cumsum(sizes)

    G_pad = _round_up(G, TN)
    num_tiles = G_pad // TN

    # per-gene nn.Linear(n, 1) init range
    kw, kb = jax.random.split(key)
    scale_per_gene = 1.0 / np.sqrt(np.asarray(sizes, np.float32))
    per_snp_scale = jnp.asarray(np.repeat(scale_per_gene, sizes))
    w_flat = jax.random.uniform(kw, (S,), jnp.float32, -1.0, 1.0) * per_snp_scale
    bias = jax.random.uniform(kb, (G,), jnp.float32, -1.0, 1.0) * jnp.asarray(scale_per_gene)
    w_np = np.asarray(w_flat)

    # per-gene-tile SNP windows [ws[t], ws[t]+K_pad), ws KB-aligned (round down)
    ws = np.zeros(num_tiles, np.int64)
    span = np.zeros(num_tiles, np.int64)
    for t in range(num_tiles):
        g0, g1 = t * TN, min((t + 1) * TN, G)
        if g0 >= G:
            continue
        lo, hi = int(starts[g0]), int(starts[g1])
        ws[t] = (lo // KB) * KB
        span[t] = hi - ws[t]
    K_pad = max(KB, _round_up(int(span.max()), KB))
    S_pad = max(_round_up(S, KB), int((ws + K_pad).max()))
    off_blocks = (ws // KB).astype(np.int32)

    # banded weight slabs: only each tile's own (nonzero) gene weights are kept
    Wb = np.zeros((num_tiles, K_pad, TN), np.float32)
    for g in range(G):
        t, c = g // TN, g % TN
        s, n = int(starts[g]), sizes[g]
        r0 = s - int(ws[t])
        Wb[t, r0:r0 + n, c] = w_np[s:s + n]

    b_pad = np.zeros((1, G_pad), np.float32)
    b_pad[0, :G] = np.asarray(bias)

    # dense W only for the correctness reference (never fed to the kernel)
    Wd = np.zeros((S, G), np.float32)
    for g in range(G):
        s, n = int(starts[g]), sizes[g]
        Wd[s:s + n, g] = w_np[s:s + n]

    return dict(
        G=G, S=S, G_pad=G_pad, S_pad=int(S_pad), K_pad=int(K_pad), TN=TN, KB=KB,
        off_blocks=jnp.asarray(off_blocks),
        w_slabs=jnp.asarray(Wb).astype(jnp.bfloat16),
        b_pad=jnp.asarray(b_pad),
        W_dense=jnp.asarray(Wd),
        bias=bias,
    )


def net_forward(x, params, *, tb=128):
    # Full Net.forward up to (and excluding) the external TabNetNoEmbeddings.
    # (At toy sizes a plain XLA x@W fusion would beat the pallas_call launch
    #  overhead; the Pallas path is used unconditionally here for the demo.)
    B, S = x.shape
    assert S == params["S"]
    TB = min(tb, _round_up(B, 8))
    B_pad = _round_up(B, TB)
    x_pad = jnp.pad(x.astype(jnp.bfloat16),
                    ((0, B_pad - B), (0, params["S_pad"] - S)))
    out = snp_to_gene(x_pad, params["w_slabs"], params["b_pad"],
                      params["off_blocks"],
                      TB=TB, TN=params["TN"], KB=params["KB"])
    return out[:B, :params["G"]]


if __name__ == "__main__":
    connections = sortAllSNPs(build_connections())
    sizes = gene_sizes(connections)

    key = jax.random.PRNGKey(0)
    k_params, k_x = jax.random.split(key)
    params = build_packed_params(sizes, k_params)

    batch = 32
    x = jax.random.normal(k_x, (batch, params["S"]), dtype=jnp.float32)

    out = jax.block_until_ready(net_forward(x, params))
    assert out.shape == (batch, params["G"])

    # pure-JAX reference (same bf16-quantized inputs, f32 accumulation)
    x_q = x.astype(jnp.bfloat16).astype(jnp.float32)
    Wd_q = params["W_dense"].astype(jnp.bfloat16).astype(jnp.float32)
    ref = x_q @ Wd_q + params["bias"][None, :]
    ref = jnp.where(ref >= 0, ref, 0.1 * ref)   # smallBlock.leReLU
    ref = jnp.where(ref >= 0, ref, 0.2 * ref)   # Net.leReLU
    max_err = float(jnp.max(jnp.abs(out - ref)))
    assert bool(jnp.allclose(out, ref, atol=1e-3, rtol=1e-3)), max_err

    print("KERNEL_OK")
</pallas_src>

<mosaic_0001>
module attributes {stable_mosaic.version = 11 : i64} {
  func.func @snp_to_gene_kernel(%arg0: i32, %arg1: i32, %arg2: i32, %arg3: memref<2xi32, #tpu.memory_space<smem>>, %arg4: memref<32x128xbf16, #tpu.memory_space<vmem>>, %arg5: memref<1x128x128xbf16, #tpu.memory_space<vmem>>, %arg6: memref<1x128xf32, #tpu.memory_space<vmem>>, %arg7: memref<32x128xf32, #tpu.memory_space<vmem>>, %arg8: memref<32x128xf32, #tpu.memory_space<vmem>>) attributes {dimension_semantics = [#tpu.dimension_semantics<parallel>, #tpu.dimension_semantics<parallel>, #tpu.dimension_semantics<arbitrary>], iteration_bounds = array<i64: 1, 2, 10>, scalar_prefetch = 1 : i64, scratch_operands = 1 : i64, tpu.core_type = #tpu.core_type<tc>, window_params = [{transform_indices = @transform_0, window_bounds = array<i64: 32, 128>}, {transform_indices = @transform_1, window_bounds = array<i64: 1, 128, 128>}, {transform_indices = @transform_2, window_bounds = array<i64: 1, 128>}, {transform_indices = @transform_3, window_bounds = array<i64: 32, 128>}]} {
    %c0_i32 = arith.constant 0 : i32
    %0 = arith.cmpi eq, %arg2, %c0_i32 : i32
    %1 = arith.extui %0 : i1 to i32
    %c0_i32_0 = arith.constant 0 : i32
    %2 = arith.cmpi ne, %1, %c0_i32_0 : i32
    scf.if %2 {
      %cst_10 = arith.constant 0.000000e+00 : f32
      %13 = vector.broadcast %cst_10 : f32 to vector<32x128xf32>
      %c0_11 = arith.constant 0 : index
      %c0_12 = arith.constant 0 : index
      %14 = vector.load %arg8[%c0_11, %c0_12] : memref<32x128xf32, #tpu.memory_space<vmem>>, vector<32x128xf32>
      tpu.vector_store %arg8[%c0_11, %c0_12], %13 {strides = array<i32>} : memref<32x128xf32, #tpu.memory_space<vmem>>, vector<32x128xf32>,
    } else {
    }
    %c0 = arith.constant 0 : index
    %c0_1 = arith.constant 0 : index
    %3 = vector.load %arg8[%c0, %c0_1] : memref<32x128xf32, #tpu.memory_space<vmem>>, vector<32x128xf32>
    %c0_2 = arith.constant 0 : index
    %c0_3 = arith.constant 0 : index
    %4 = vector.load %arg4[%c0_2, %c0_3] : memref<32x128xbf16, #tpu.memory_space<vmem>>, vector<32x128xbf16>
    %c0_4 = arith.constant 0 : index
    %c0_5 = arith.constant 0 : index
    %c0_6 = arith.constant 0 : index
    %5 = vector.load %arg5[%c0_4, %c0_5, %c0_6] : memref<1x128x128xbf16, #tpu.memory_space<vmem>>, vector<1x128x128xbf16>
    %6 = vector.shape_cast %5 : vector<1x128x128xbf16> to vector<128x128xbf16>
    %cst = arith.constant dense<0.000000e+00> : vector<32x128xf32>
    %7 = tpu.matmul %4, %6, %cst {dimension_numbers = #tpu.dot_dimension_numbers<[1], [0], [0], [1], [0, 0, 1, 1], [], []>} : vector<32x128xbf16>, vector<128x128xbf16>, vector<32x128xf32> -> vector<32x128xf32>
    %8 = arith.addf %3, %7 : vector<32x128xf32>
    %c0_7 = arith.constant 0 : index
    %c0_8 = arith.constant 0 : index
    %9 = vector.load %arg8[%c0_7, %c0_8] : memref<32x128xf32, #tpu.memory_space<vmem>>, vector<32x128xf32>
    tpu.vector_store %arg8[%c0_7, %c0_8], %8 {strides = array<i32>} : memref<32x128xf32, #tpu.memory_space<vmem>>, vector<32x128xf32>,
    %c9_i32 = arith.constant 9 : i32
    %10 = arith.cmpi eq, %arg2, %c9_i32 : i32
    %11 = arith.extui %10 : i1 to i32
    %c0_i32_9 = arith.constant 0 : i32
    %12 = arith.cmpi ne, %11, %c0_i32_9 : i32
    scf.if %12 {
      %c0_10 = arith.constant 0 : index
      %c0_11 = arith.constant 0 : index
      %13 = vector.load %arg8[%c0_10, %c0_11] : memref<32x128xf32, #tpu.memory_space<vmem>>, vector<32x128xf32>
      %c0_12 = arith.constant 0 : index
      %c0_13 = arith.constant 0 : index
      %14 = vector.load %arg6[%c0_12, %c0_13] : memref<1x128xf32, #tpu.memory_space<vmem>>, vector<1x128xf32>
      %15 = vector.broadcast %14 : vector<1x128xf32> to vector<32x128xf32>
      %16 = arith.addf %13, %15 : vector<32x128xf32>
      %cst_14 = arith.constant 0.000000e+00 : f32
      %17 = vector.broadcast %cst_14 : f32 to vector<32x128xf32>
      %18 = arith.cmpf oge, %16, %17 : vector<32x128xf32>
      %cst_15 = arith.constant 2.000000e-02 : f32
      %19 = vector.broadcast %cst_15 : f32 to vector<32x128xf32>
      %20 = arith.mulf %19, %16 : vector<32x128xf32>
      %21 = arith.select %18, %16, %20 : vector<32x128xi1>, vector<32x128xf32>
      %c0_16 = arith.constant 0 : index
      %c0_17 = arith.constant 0 : index
      %22 = vector.load %arg7[%c0_16, %c0_17] : memref<32x128xf32, #tpu.memory_space<vmem>>, vector<32x128xf32>
      tpu.vector_store %arg7[%c0_16, %c0_17], %21 {strides = array<i32>} : memref<32x128xf32, #tpu.memory_space<vmem>>, vector<32x128xf32>,
    } else {
    }
    return
  }
  func.func @transform_0(%arg0: i32, %arg1: i32, %arg2: i32, %arg3: memref<2xi32, #tpu.memory_space<smem>>) -> (i32, i32) {
    %0 = arith.index_cast %arg1 : i32 to index
    %1 = memref.load %arg3[%0] : memref<2xi32, #tpu.memory_space<smem>>
    %2 = arith.addi %1, %arg2 : i32
    %c0_i32 = arith.constant 0 : i32
    return %arg0, %2 : i32, i32
  }
  func.func @transform_1(%arg0: i32, %arg1: i32, %arg2: i32, %arg3: memref<2xi32, #tpu.memory_space<smem>>) -> (i32, i32, i32) {
    %c0_i32 = arith.constant 0 : i32
    %c0_i32_0 = arith.constant 0 : i32
    return %arg1, %arg2, %c0_i32 : i32, i32, i32
  }
  func.func @transform_2(%arg0: i32, %arg1: i32, %arg2: i32, %arg3: memref<2xi32, #tpu.memory_space<smem>>) -> (i32, i32) {
    %c0_i32 = arith.constant 0 : i32
    %c0_i32_0 = arith.constant 0 : i32
    return %c0_i32, %arg1 : i32, i32
  }
  func.func @transform_3(%arg0: i32, %arg1: i32, %arg2: i32, %arg3: memref<2xi32, #tpu.memory_space<smem>>) -> (i32, i32) {
    %c0_i32 = arith.constant 0 : i32
    return %arg0, %arg1 : i32, i32
  }
}

</mosaic_0001>

<llo_original>
// kernel: tpu_custom_call.1
$region0: #{tpu_custom_call.1}
  #allocation0 [shape = 'u32[]', space=smem, size = 0x4, offset = 0x4, fixed_abs, tag = 'smem constant byte address 0x4 - core index']
  #allocation1 [shape = 'u32[144,128]{1,0:T(1,128)}', space=vmem, size = 0x12000, scoped, tag = 'internal scratch']
  #allocation2 [shape = 'f32[32,128]{1,0:T(8,128)}', space=vmem, size = 0x4000, scoped, tag = 'scratch operand']
  #allocation3 [shape = 's32[1]{0}', space=sflag, size = 0x4, scoped, tag = 'scoped memory for tpu_custom_call.1']
  #allocation4 [shape = 'u8[512]{0}', space=smem, size = 0x200, scoped, tag = 'prefetched SMEM operand 0']
  %s0 = inlined_call_operand.hbm [shape: s32[2], index: 0, kind: input, shape index: {}]
  %s1 = inlined_call_operand.hbm [shape: bf16[32,2432], index: 1, kind: input, shape index: {}]
  %s2 = inlined_call_operand.hbm [shape: bf16[2,1280,128], index: 2, kind: input, shape index: {}]
  %s3 = inlined_call_operand.vmem [shape: f32[1,256], index: 3, kind: input, shape index: {}]
  %s4 = inlined_call_operand.hbm [shape: f32[32,256], index: 4, kind: output, shape index: {}]
  %s5 = sld [smem:[#allocation0]]
  $region61: #{tpu_custom_call.1} parent=0
    _
  %s7 = ssub.s32 1, %s5
  %s8 = scalar_select 0, %s7, %s5
  %10 = dma.hbm_to_smem %s0, 16, [#allocation4], [#allocation3]
  %11 = dma.done [#allocation3], 16
  %12 = sfence
  $region1: #{tpu_custom_call.1} parent=0
    #allocation5 [shape = 'u8[16384]{0}', space=vmem, size = 0x4000, scoped, tag = 'input window, operand 1']
    #allocation6 [shape = 's32[2]{0}', space=sflag, size = 0x8, scoped, tag = 'scoped memory for tpu_custom_call.1']
    #allocation7 [shape = 's32[2]{0}', space=sflag, size = 0x8, scoped, tag = 'scoped memory for tpu_custom_call.1']
    #allocation8 [shape = 'u8[65536]{0}', space=vmem, size = 0x10000, scoped, tag = 'input window, operand 2']
    #allocation9 [shape = 's32[2]{0}', space=sflag, size = 0x8, scoped, tag = 'scoped memory for tpu_custom_call.1']
    #allocation10 [shape = 'u8[32768]{0}', space=vmem, size = 0x8000, scoped, tag = 'output window, operand 0']
    %13 = vsyncpa [#allocation6], 0
    %s14 = scalar_lea.sflag [#allocation6], 1
    %15 = vsyncpa %s14, 0
    %16 = vsyncpa [#allocation9], 0
    %s17 = scalar_lea.sflag [#allocation9], 1
    %18 = vsyncpa %s17, 0
    %19 = vsyncpa [#allocation7], 0
    %s20 = scalar_lea.sflag [#allocation7], 1
    %21 = vsyncpa %s20, 0
    loop: start=0, step=1, limit=22
    $region2: #{tpu_custom_call.1} parent=1 // loop_pre_header
      _
    $region3: #{tpu_custom_call.1} parent=1 // loop_header
      %s23 = sphi 0, %s27
      %p24 = scmp.ge.s32.totalorder %s23, 22
      %s30 = sphi 0, %s49
      %s31 = sphi 0, %s45
      %s32 = sphi 0, %s41
      %s33 = sphi 0, %s30
      %s34 = sphi 0, %s31
      %s35 = sphi 0, %s32
      %s36 = sphi 0, %s33
      %s37 = sphi 0, %s34
      %s38 = sphi 0, %s35
      %s58 = sphi 0, %s60
      %s61 = sphi 0, %s58
      %s62 = sphi 0, %s61
      %s78 = sphi 0, %s62
      %s86 = sphi 0, %s88
      %s89 = sphi 0, %s86
      %s90 = sphi 0, %s89
      %s106 = sphi 0, %s90
      %s112 = sphi 0, %s114
      %s115 = sphi 0, %s112
      %s116 = sphi 0, %s115
      %s132 = sphi 0, %s116
      %s140 = sphi 0, %s142
      %s143 = sphi 0, %s140
      %s144 = sphi 0, %s143
      %s160 = sphi 0, %s144
    $region4: #{tpu_custom_call.1} parent=1 // loop_header_branch
      %26 = sbr.rel (%p24) target = $region8
    $region5: #{tpu_custom_call.1} parent=1 // loop_body
      %s28 = ssub.s32 %s23, 1
      %s29 = ssub.s32 %s23, 2
      %s39 = sadd.s32 1, %s32
      %p40 = scmp.ge.s32.totalorder %s39, 10
      %s41 = scalar_select %p40, 0, %s39
      %s42 = sadd.s32 1, %s31
      %s43 = scalar_select %p40, %s42, %s31
      %p44 = scmp.ge.s32.totalorder %s43, 2
      %s45 = scalar_select %p44, 0, %s43
      %s46 = sadd.s32 1, %s30
      %s47 = scalar_select %p44, %s46, %s30
      %p48 = scmp.ge.s32.totalorder %s47, 1
      %s49 = scalar_select %p48, 0, %s47
      %s50 = sld [smem:[#allocation4 + %s31]]
      %s51 = sadd.s32 %s50, %s32
      %s52 = sld [smem:[#allocation4 + %s45]]
      %s53 = sadd.s32 %s52, %s41
      %s54 = ssub.s32 %s30, %s49
      %s55 = ssub.s32 %s51, %s53
      %s56 = sor.u32 %s54, %s55
      %p57 = scmp.eq.s32.totalorder %s56, 0
      %s59 = sadd.s32 %s58, 1
      %s60 = scalar_select %p57, %s58, %s59
      %p63 = pneg %p57
      %p64 = scmp.eq.s32.totalorder %s23, 19
      %p65 = por %p63, %p64
      %p66 = scmp.ne.s32.totalorder %s58, %s61
      %p67 = scmp.eq.s32.totalorder %s23, 0
      %p68 = por %p66, %p67
      %p69 = scmp.ne.s32.totalorder %s58, %s61
      %p70 = scmp.eq.s32.totalorder %s28, 19
      %p71 = por %p69, %p70
      %p72 = scmp.ne.s32.totalorder %s61, %s62
      %p73 = scmp.eq.s32.totalorder %s28, 0
      %p74 = por %p72, %p73
      %p75 = scmp.ne.s32.totalorder %s61, %s62
      %p76 = scmp.eq.s32.totalorder %s29, 19
      %p77 = por %p75, %p76
      %p79 = scmp.ne.s32.totalorder %s62, %s78
      %p80 = scmp.eq.s32.totalorder %s29, 0
      %p81 = por %p79, %p80
      %s82 = ssub.s32 %s31, %s45
      %s83 = ssub.s32 %s32, %s41
      %s84 = sor.u32 %s82, %s83
      %p85 = scmp.eq.s32.totalorder %s84, 0
      %s87 = sadd.s32 %s86, 1
      %s88 = scalar_select %p85, %s86, %s87
      %p91 = pneg %p85
      %p92 = scmp.eq.s32.totalorder %s23, 19
      %p93 = por %p91, %p92
      %p94 = scmp.ne.s32.totalorder %s86, %s89
      %p95 = scmp.eq.s32.totalorder %s23, 0
      %p96 = por %p94, %p95
      %p97 = scmp.ne.s32.totalorder %s86, %s89
      %p98 = scmp.eq.s32.totalorder %s28, 19
      %p99 = por %p97, %p98
      %p100 = scmp.ne.s32.totalorder %s89, %s90
      %p101 = scmp.eq.s32.totalorder %s28, 0
      %p102 = por %p100, %p101
      %p103 = scmp.ne.s32.totalorder %s89, %s90
      %p104 = scmp.eq.s32.totalorder %s29, 19
      %p105 = por %p103, %p104
      %p107 = scmp.ne.s32.totalorder %s90, %s106
      %p108 = scmp.eq.s32.totalorder %s29, 0
      %p109 = por %p107, %p108
      %s110 = ssub.s32 %s31, %s45
      %p111 = scmp.eq.s32.totalorder %s110, 0
      %s113 = sadd.s32 %s112, 1
      %s114 = scalar_select %p111, %s112, %s113
      %p117 = pneg %p111
      %p118 = scmp.eq.s32.totalorder %s23, 19
      %p119 = por %p117, %p118
      %p120 = scmp.ne.s32.totalorder %s112, %s115
      %p121 = scmp.eq.s32.totalorder %s23, 0
      %p122 = por %p120, %p121
      %p123 = scmp.ne.s32.totalorder %s112, %s115
      %p124 = scmp.eq.s32.totalorder %s28, 19
      %p125 = por %p123, %p124
      %p126 = scmp.ne.s32.totalorder %s115, %s116
      %p127 = scmp.eq.s32.totalorder %s28, 0
      %p128 = por %p126, %p127
      %p129 = scmp.ne.s32.totalorder %s115, %s116
      %p130 = scmp.eq.s32.totalorder %s29, 19
      %p131 = por %p129, %p130
      %p133 = scmp.ne.s32.totalorder %s116, %s132
      %p134 = scmp.eq.s32.totalorder %s29, 0
      %p135 = por %p133, %p134
      %s136 = ssub.s32 %s30, %s49
      %s137 = ssub.s32 %s31, %s45
      %s138 = sor.u32 %s136, %s137
      %p139 = scmp.eq.s32.totalorder %s138, 0
      %s141 = sadd.s32 %s140, 1
      %s142 = scalar_select %p139, %s140, %s141
      %p145 = pneg %p139
      %p146 = scmp.eq.s32.totalorder %s23, 19
      %p147 = por %p145, %p146
      %p148 = scmp.ne.s32.totalorder %s140, %s143
      %p149 = scmp.eq.s32.totalorder %s23, 0
      %p150 = por %p148, %p149
      %p151 = scmp.ne.s32.totalorder %s140, %s143
      %p152 = scmp.eq.s32.totalorder %s28, 19
      %p153 = por %p151, %p152
      %p154 = scmp.ne.s32.totalorder %s143, %s144
      %p155 = scmp.eq.s32.totalorder %s28, 0
      %p156 = por %p154, %p155
      %p157 = scmp.ne.s32.totalorder %s143, %s144
      %p158 = scmp.eq.s32.totalorder %s29, 19
      %p159 = por %p157, %p158
      %p161 = scmp.ne.s32.totalorder %s144, %s160
      %p162 = scmp.eq.s32.totalorder %s29, 0
      %p163 = por %p161, %p162
      %p164 = scmp.le.s32.totalorder 1, %s23
      %p165 = scmp.lt.s32.totalorder %s23, 21
      %p166 = pnand %p164, %p165
      %p167 = pneg %p166
      // Predicated region
      $region9: #{tpu_custom_call.1} parent=5 // pred_check
        _
      $region10: #{tpu_custom_call.1} parent=5 // pred_check_branch
        %169 = sbr.rel (%p166) target = $region12
      $region11: #{tpu_custom_call.1} parent=5 // pred_region
        %s170 = ssub.s32 %s23, 1
      $region12: #{tpu_custom_call.1} parent=5 // pred_fallthru
        _
      %p171 = scmp.lt.s32.totalorder %s23, 20
      // Predicated region
      $region13: #{tpu_custom_call.1} parent=5 // pred_check
        %p172 = pneg %p171
      $region14: #{tpu_custom_call.1} parent=5 // pred_check_branch
        %174 = sbr.rel (%p172) target = $region16
      $region15: #{tpu_custom_call.1} parent=5 // pred_region
        // Predicated region
        $region17: #{tpu_custom_call.1} parent=15 // pred_check
          %p175 = pneg %p68
        $region18: #{tpu_custom_call.1} parent=15 // pred_check_branch
          %177 = sbr.rel (%p175) target = $region20
        $region19: #{tpu_custom_call.1} parent=15 // pred_region
          %s178 = sand.u32 %s58, 1
          %s179 = scalar_lea.sflag [#allocation6], %s178
          %s180 = sand.u32 %s58, 1
          %s181 = smul.addr %s180, 16
          %s182 = scalar_lea.vmem [#allocation5], %s181
          %s183 = sld [smem:[#allocation4 + %s31]]
          %s184 = sadd.s32 %s183, %s32
          %s185 = smul.u32 4, %s30
          %s187 = ssub.s32 256, 256
          %188 = vsyncadd %s179, %s187
          %s189 = smul.addr %s185, 19
          %s190 = sadd.s32 %s184, %s189
          %s191 = smul.addr %s190, 64
          %s192 = scalar_lea.hbm %s1, %s191
          %s193 = sshll.u32 %s182, 4
          %s194 = int_to_ptr.vmem [resolvable:$true] %s193
          %199 = dma.hbm_to_vmem [thread:$0]  %s192, 256, %s194, %s179, 1216, 64, 4
        $region20: #{tpu_custom_call.1} parent=15 // pred_fallthru
          _
        // Predicated region
        $region21: #{tpu_custom_call.1} parent=15 // pred_check
          %p200 = pneg %p96
        $region22: #{tpu_custom_call.1} parent=15 // pred_check_branch
          %202 = sbr.rel (%p200) target = $region24
        $region23: #{tpu_custom_call.1} parent=15 // pred_region
          %s203 = sand.u32 %s86, 1
          %s204 = scalar_lea.sflag [#allocation9], %s203
          %s205 = sand.u32 %s86, 1
          %s206 = smul.addr %s205, 64
          %s207 = scalar_lea.vmem [#allocation8], %s206
          %s208 = smul.u32 16, %s32
          %s210 = ssub.s32 1024, 1024
          %211 = vsyncadd %s204, %s210
          %s212 = smul.addr %s31, 160
          %s213 = sadd.s32 %s208, %s212
          %s214 = smul.addr %s213, 64
          %s215 = scalar_lea.hbm %s2, %s214
          %s216 = sshll.u32 %s207, 4
          %s217 = int_to_ptr.vmem [resolvable:$true] %s216
          %222 = dma.hbm_to_vmem [thread:$0]  %s215, 1024, %s217, %s204, 64, 64, 4
        $region24: #{tpu_custom_call.1} parent=15 // pred_fallthru
          _
        // Predicated region
        $region25: #{tpu_custom_call.1} parent=15 // pred_check
          %p223 = pneg %p122
        $region26: #{tpu_custom_call.1} parent=15 // pred_check_branch
          %225 = sbr.rel (%p223) target = $region28
        $region27: #{tpu_custom_call.1} parent=15 // pred_region
          %p226 = scmp.lt.s32.totalorder %s31, 1
          %s227 = scalar_select %p226, %s31, 1
          %s228 = scalar_lea.vmem %s3, %s227
        $region28: #{tpu_custom_call.1} parent=15 // pred_fallthru
          _
      $region16: #{tpu_custom_call.1} parent=5 // pred_fallthru
        _
      %p229 = scmp.le.s32.totalorder 1, %s23
      %p230 = scmp.lt.s32.totalorder %s23, 21
      %p231 = pnand %p229, %p230
      %p232 = pneg %p231
      // Predicated region
      $region29: #{tpu_custom_call.1} parent=5 // pred_check
        _
      $region30: #{tpu_custom_call.1} parent=5 // pred_check_branch
        %234 = sbr.rel (%p231) target = $region32
      $region31: #{tpu_custom_call.1} parent=5 // pred_region
        %s235 = ssub.s32 %s23, 1
        %s236 = sand.u32 %s61, 1
        %s237 = scalar_lea.sflag [#allocation6], %s236
        %s238 = sand.u32 %s61, 1
        %s239 = smul.addr %s238, 16
        %s240 = scalar_lea.vmem [#allocation5], %s239
        // Predicated region
        $region33: #{tpu_custom_call.1} parent=31 // pred_check
          %p241 = pneg %p74
        $region34: #{tpu_custom_call.1} parent=31 // pred_check_branch
          %243 = sbr.rel (%p241) target = $region36
        $region35: #{tpu_custom_call.1} parent=31 // pred_region
          %244 = dma.done %s237, 256
        $region36: #{tpu_custom_call.1} parent=31 // pred_fallthru
          _
        %s245 = sand.u32 %s89, 1
        %s246 = scalar_lea.sflag [#allocation9], %s245
        %s247 = sand.u32 %s89, 1
        %s248 = smul.addr %s247, 64
        %s249 = scalar_lea.vmem [#allocation8], %s248
        // Predicated region
        $region37: #{tpu_custom_call.1} parent=31 // pred_check
          %p250 = pneg %p102
        $region38: #{tpu_custom_call.1} parent=31 // pred_check_branch
          %252 = sbr.rel (%p250) target = $region40
        $region39: #{tpu_custom_call.1} parent=31 // pred_region
          %253 = dma.done %s246, 1024
        $region40: #{tpu_custom_call.1} parent=31 // pred_fallthru
          _
        %s254 = sand.u32 %s61, 1
        %s255 = scalar_lea.sflag [#allocation6], %s254
        %s256 = sand.u32 %s61, 1
        %s257 = smul.addr %s256, 16
        %s258 = scalar_lea.vmem [#allocation5], %s257
        %p259 = pneg %p74
        %p260 = pneg %p71
        %s261 = sand.u32 %s89, 1
        %s262 = scalar_lea.sflag [#allocation9], %s261
        %s263 = sand.u32 %s89, 1
        %s264 = smul.addr %s263, 64
        %s265 = scalar_lea.vmem [#allocation8], %s264
        %p266 = pneg %p102
        %p267 = pneg %p99
        %p268 = scmp.lt.s32.totalorder %s34, 1
        %s269 = scalar_select %p268, %s34, 1
        %s270 = scalar_lea.vmem %s3, %s269
        %p271 = pneg %p128
        %p272 = pneg %p125
        %p273 = pneg %p156
        %p274 = pneg %p153
        %s275 = sand.u32 %s143, 1
        %s276 = scalar_lea.sflag [#allocation7], %s275
        %s277 = sand.u32 %s143, 1
        %s278 = smul.addr %s277, 32
        %s279 = scalar_lea.vmem [#allocation10], %s278
        %s280 = sld [smem:[#allocation4 + %s34]]
        %s281 = sadd.s32 %s280, %s35
        %s282 = smul.u32 4, %s33
        %s283 = smul.u32 16, %s35
        %p284 = scmp.lt.s32.totalorder %s34, 1
        %s285 = scalar_select %p284, %s34, 1
        %s286 = scalar_lea.vmem %s3, %s285
        %s287 = smul.u32 4, %s33
        %p289 = scmp.eq.s32.totalorder %s35, 0
        // Predicated region
        $region41: #{tpu_custom_call.1} parent=31 // pred_check
          %p290 = pneg %p289
        $region42: #{tpu_custom_call.1} parent=31 // pred_check_branch
          %292 = sbr.rel (%p290) target = $region44
        $region43: #{tpu_custom_call.1} parent=31 // pred_region
          %293 = vst [vmem:[#allocation2] sm:$0xff] 0.0
          %294 = vst [vmem:[#allocation2 + $0x8] sm:$0xff] 0.0
          %295 = vst [vmem:[#allocation2 + $0x10] sm:$0xff] 0.0
          %296 = vst [vmem:[#allocation2 + $0x18] sm:$0xff] 0.0
        $region44: #{tpu_custom_call.1} parent=31 // pred_fallthru
          _
        %v297 = vld [vmem:[#allocation2] sm:$0xff]
        %v298 = vld [vmem:[#allocation2 + $0x8] sm:$0xff]
        %v299 = vld [vmem:[#allocation2 + $0x10] sm:$0xff]
        %v300 = vld [vmem:[#allocation2 + $0x18] sm:$0xff]
        %v301 = vld [vmem:[%s240] sm:$0xf]
        %v302 = vld [vmem:[%s240 + $0x4] sm:$0xf]
        %v303 = vld [vmem:[%s240 + $0x8] sm:$0xf]
        %v304 = vld [vmem:[%s240 + $0xc] sm:$0xf]
        %v305 = vld [vmem:[%s249] sm:$0xf]
        %v306 = vld [vmem:[%s249 + $0x4] sm:$0xf]
        %v307 = vld [vmem:[%s249 + $0x8] sm:$0xf]
        %v308 = vld [vmem:[%s249 + $0xc] sm:$0xf]
        %v309 = vld [vmem:[%s249 + $0x10] sm:$0xf]
        %v310 = vld [vmem:[%s249 + $0x14] sm:$0xf]
        %v311 = vld [vmem:[%s249 + $0x18] sm:$0xf]
        %v312 = vld [vmem:[%s249 + $0x1c] sm:$0xf]
        %v313 = vld [vmem:[%s249 + $0x20] sm:$0xf]
        %v314 = vld [vmem:[%s249 + $0x24] sm:$0xf]
        %v315 = vld [vmem:[%s249 + $0x28] sm:$0xf]
        %v316 = vld [vmem:[%s249 + $0x2c] sm:$0xf]
        %v317 = vld [vmem:[%s249 + $0x30] sm:$0xf]
        %v318 = vld [vmem:[%s249 + $0x34] sm:$0xf]
        %v319 = vld [vmem:[%s249 + $0x38] sm:$0xf]
        %v320 = vld [vmem:[%s249 + $0x3c] sm:$0xf]
        %v325 = vunpack.c.l.b16 %v301
        %v326 = vunpack.c.l.b16 %v302
        %v327 = vunpack.c.l.b16 %v303
        %v328 = vunpack.c.l.b16 %v304
        %v329 = vpack.c.b16 %v326, %v325
        %v330 = vpack.c.b16 %v328, %v327
        %v349 = vunpack.c.l.b16 %v305
        %v350 = vunpack.c.l.b16 %v306
        %v351 = vunpack.c.l.b16 %v307
        %v352 = vunpack.c.l.b16 %v308
        %v353 = vunpack.c.l.b16 %v309
        %v354 = vunpack.c.l.b16 %v310
        %v355 = vunpack.c.l.b16 %v311
        %v356 = vunpack.c.l.b16 %v312
        %v357 = vunpack.c.l.b16 %v313
        %v358 = vunpack.c.l.b16 %v314
        %v359 = vunpack.c.l.b16 %v315
        %v360 = vunpack.c.l.b16 %v316
        %v361 = vunpack.c.l.b16 %v317
        %v362 = vunpack.c.l.b16 %v318
        %v363 = vunpack.c.l.b16 %v319
        %v364 = vunpack.c.l.b16 %v320
        %v365 = vpack.c.b16 %v350, %v349
        %v366 = vpack.c.b16 %v352, %v351
        %v367 = vpack.c.b16 %v354, %v353
        %v368 = vpack.c.b16 %v356, %v355
        %v369 = vpack.c.b16 %v358, %v357
        %v370 = vpack.c.b16 %v360, %v359
        %v371 = vpack.c.b16 %v362, %v361
        %v372 = vpack.c.b16 %v364, %v363
        %381 = vmatprep.subr.bf16.mxu0 0
        %382 = vmatpush1.bf16.msra.mxu0 %v365
        %383 = vmatprep.subr.bf16.mxu0 0
        %384 = vmatpush1.bf16.msra.mxu0 %v366
        %385 = vmatprep.subr.bf16.mxu0 0
        %386 = vmatpush1.bf16.msra.mxu0 %v367
        %387 = vmatprep.subr.bf16.mxu0 0
        %388 = vmatpush1.bf16.msra.mxu0 %v368
        %389 = vmatprep.subr.bf16.mxu0 0
        %390 = vmatpush1.bf16.msra.mxu0 %v369
        %391 = vmatprep.subr.bf16.mxu0 0
        %392 = vmatpush1.bf16.msra.mxu0 %v370
        %393 = vmatprep.subr.bf16.mxu0 0
        %394 = vmatpush1.bf16.msra.mxu0 %v371
        %395 = vmatprep.subr.bf16.mxu0 0
        %396 = vmatpush1.bf16.msra.mxu0 %v372
        %397 = vmatprep.subr.bf16.mxu0 0
        %398 = vmatpush1.bf16.msra.mxu0 0
        %399 = vmatprep.subr.bf16.mxu0 0
        %400 = vmatpush1.bf16.msra.mxu0 0
        %401 = vmatprep.subr.bf16.mxu0 0
        %402 = vmatpush1.bf16.msra.mxu0 0
        %403 = vmatprep.subr.bf16.mxu0 0
        %404 = vmatpush1.bf16.msra.mxu0 0
        %405 = vmatprep.subr.bf16.mxu0 0
        %406 = vmatpush1.bf16.msra.mxu0 0
        %407 = vmatprep.subr.bf16.mxu0 0
        %408 = vmatpush1.bf16.msra.mxu0 0
        %409 = vmatprep.subr.bf16.mxu0 0
        %410 = vmatpush1.bf16.msra.mxu0 0
        %411 = vmatprep.subr.bf16.mxu0 0
        %412 = vmatpush1.bf16.msra.mxu0 0
        %413 = vmatprep.mubr.bf16.mxu0 0
        %414 = vmatmul.mubr.bf16.gmra.mrb[0].mxu0 %v329
        %v415 = vpop.f32.mrb[0].mxu0
        %v416 = vadd.f32 0.0, %v415
        %v417 = vpop.f32.mrb[0].mxu0
        %v418 = vpop.f32.mrb[0].mxu0
        %v419 = vadd.f32 0.0, %v418
        %v420 = vpop.f32.mrb[0].mxu0
        %421 = vmatprep.mubr.bf16.mxu0 0
        %422 = vmatmul.mubr.bf16.gmra.mrb[0].mxu0 %v330
        %v423 = vpop.f32.mrb[0].mxu0
        %v424 = vadd.f32 0.0, %v423
        %v425 = vpop.f32.mrb[0].mxu0
        %v426 = vpop.f32.mrb[0].mxu0
        %v427 = vadd.f32 0.0, %v426
        %v428 = vpop.f32.mrb[0].mxu0
        %429 = vdwg.mxu0
        %v430 = vadd.f32 %v297, %v416
        %v431 = vadd.f32 %v298, %v419
        %v432 = vadd.f32 %v299, %v424
        %v433 = vadd.f32 %v300, %v427
        %434 = vst [vmem:[#allocation2] sm:$0xff] %v430
        %435 = vst [vmem:[#allocation2 + $0x8] sm:$0xff] %v431
        %436 = vst [vmem:[#allocation2 + $0x10] sm:$0xff] %v432
        %437 = vst [vmem:[#allocation2 + $0x18] sm:$0xff] %v433
        %p438 = scmp.eq.s32.totalorder %s35, 9
        // Predicated region
        $region45: #{tpu_custom_call.1} parent=31 // pred_check
          %p439 = pneg %p438
        $region46: #{tpu_custom_call.1} parent=31 // pred_check_branch
          %441 = sbr.rel (%p439) target = $region48
        $region47: #{tpu_custom_call.1} parent=31 // pred_region
          %v442 = vld [vmem:[#allocation2] sm:$0xff]
          %v443 = vld [vmem:[#allocation2 + $0x8] sm:$0xff]
          %v444 = vld [vmem:[#allocation2 + $0x10] sm:$0xff]
          %v445 = vld [vmem:[#allocation2 + $0x18] sm:$0xff]
          %v446 = vld [vmem:[%s286] sm:$0x1]
          %v448 = vlaneseq
          %v449 = vshrl.u32 %v448, 7
          %v450 = vsub.s32 0, %v449
          %v451 = vrot.slane %v446, %v450
          %v453 = vadd.f32 %v442, %v451
          %v454 = vadd.f32 %v443, %v451
          %v455 = vadd.f32 %v444, %v451
          %v456 = vadd.f32 %v445, %v451
          %vm457 = vcmp.ge.f32.partialorder %v453, 0.0
          %vm458 = vcmp.ge.f32.partialorder %v454, 0.0
          %vm459 = vcmp.ge.f32.partialorder %v455, 0.0
          %vm460 = vcmp.ge.f32.partialorder %v456, 0.0
          %v461 = vmul.f32 %v453, 0.02
          %v462 = vmul.f32 %v454, 0.02
          %v463 = vmul.f32 %v455, 0.02
          %v464 = vmul.f32 %v456, 0.02
          %v465 = vsel %vm457, %v453, %v461
          %v466 = vsel %vm458, %v454, %v462
          %v467 = vsel %vm459, %v455, %v463
          %v468 = vsel %vm460, %v456, %v464
          %469 = vst [vmem:[%s279] sm:$0xff] %v465
          %470 = vst [vmem:[%s279 + $0x8] sm:$0xff] %v466
          %471 = vst [vmem:[%s279 + $0x10] sm:$0xff] %v467
          %472 = vst [vmem:[%s279 + $0x18] sm:$0xff] %v468
        $region48: #{tpu_custom_call.1} parent=31 // pred_fallthru
          _
        %s473 = sand.u32 %s143, 1
        %s474 = scalar_lea.sflag [#allocation7], %s473
        %s475 = sand.u32 %s143, 1
        %s476 = smul.addr %s475, 32
        %s477 = scalar_lea.vmem [#allocation10], %s476
        // Predicated region
        $region49: #{tpu_custom_call.1} parent=31 // pred_check
          %p478 = pneg %p153
        $region50: #{tpu_custom_call.1} parent=31 // pred_check_branch
          %480 = sbr.rel (%p478) target = $region52
        $region51: #{tpu_custom_call.1} parent=31 // pred_region
          %s481 = smul.u32 4, %s33
          %s483 = ssub.s32 512, 512
          %484 = vsyncadd %s474, %s483
          %s485 = smul.addr %s481, 2
          %s486 = sadd.s32 %s34, %s485
          %s487 = smul.addr %s486, 128
          %s488 = scalar_lea.hbm %s4, %s487
          %s489 = sshll.u32 %s477, 4
          %s490 = int_to_ptr.vmem [resolvable:$true] %s489
          %495 = dma.vmem_to_hbm [thread:$0]  %s490, 512, %s488, %s474, 128, 256, 8
        $region52: #{tpu_custom_call.1} parent=31 // pred_fallthru
          _
      $region32: #{tpu_custom_call.1} parent=5 // pred_fallthru
        _
      %p496 = scmp.le.s32.totalorder 2, %s23
      // Predicated region
      $region53: #{tpu_custom_call.1} parent=5 // pred_check
        %p497 = pneg %p496
      $region54: #{tpu_custom_call.1} parent=5 // pred_check_branch
        %499 = sbr.rel (%p497) target = $region56
      $region55: #{tpu_custom_call.1} parent=5 // pred_region
        %s500 = ssub.s32 %s23, 2
        // Predicated region
        $region57: #{tpu_custom_call.1} parent=55 // pred_check
          %p501 = pneg %p159
        $region58: #{tpu_custom_call.1} parent=55 // pred_check_branch
          %503 = sbr.rel (%p501) target = $region60
        $region59: #{tpu_custom_call.1} parent=55 // pred_region
          %s504 = sand.u32 %s144, 1
          %s505 = scalar_lea.sflag [#allocation7], %s504
          %s506 = sand.u32 %s144, 1
          %s507 = smul.addr %s506, 32
          %s508 = scalar_lea.vmem [#allocation10], %s507
          %509 = dma.done %s505, 512
        $region60: #{tpu_custom_call.1} parent=55 // pred_fallthru
          _
      $region56: #{tpu_custom_call.1} parent=5 // pred_fallthru
        _
    $region6: #{tpu_custom_call.1} parent=1 // loop_footer
      %s27 = sadd.s32 1, %s23
    $region7: #{tpu_custom_call.1} parent=1 // loop_footer_branch
      %22 = sbr.rel target = $region3
    $region8: #{tpu_custom_call.1} parent=1 // loop_exit
      _
    %510 = vsyncpa [#allocation6], 1
    %s511 = scalar_lea.sflag [#allocation6], 1
    %512 = vsyncpa %s511, 1
    %513 = vsyncpa [#allocation9], 1
    %s514 = scalar_lea.sflag [#allocation9], 1
    %515 = vsyncpa %s514, 1
    %516 = vsyncpa [#allocation7], 1
    %s517 = scalar_lea.sflag [#allocation7], 1
    %518 = vsyncpa %s517, 1

</llo_original>
